<compile_context>
chip_gen: v5e
topology: v5e:2x2
jax: 0.10.0
libtpu: 0.0.40
codegen_flags: <defaults>
</compile_context>

<pallas_src>
import jax
import jax.numpy as jnp
from jax.experimental import pallas as pl
from jax.experimental.pallas import tpu as pltpu


def _synth_kernel(slots_t_ref, mask_ref, w1t_ref, posb_t_ref, w2t_ref, b2_ref,
                  out_ref):
    # slots_t : (B, D, S)   f32  (slots, pre-transposed in wrapper)
    # mask    : (B, S, HW)  f32  (original layout, used directly as matmul RHS)
    # w1t     : (D, D)      f32  (W1^T)
    # posb_t  : (D, HW)     f32  ((pos_embed @ W1 + b1)^T, precomputed)
    # w2t     : (F, D)      f32  (W2^T)
    # b2      : (F, 1)      f32
    # out     : (F, B*HW)   f32  (lane-dense; transposed back in wrapper)
    B = slots_t_ref.shape[0]

    w1t = w1t_ref[...]
    posb_t = posb_t_ref[...]

    h_cols = []
    for b in range(B):  # static unroll; B is tiny and known at trace time
        # First Linear applied to the S slots only: (D, D) @ (D, S) -> (D, S).
        sp_t = jnp.dot(w1t, slots_t_ref[b], preferred_element_type=jnp.float32)
        # Masked broadcast (contract over slots): (D, S) @ (S, HW) -> (D, HW).
        mb_t = jnp.dot(sp_t, mask_ref[b], preferred_element_type=jnp.float32)
        # Positional/bias add + ReLU in f32 (VPU-friendly on all generations).
        h_cols.append(jnp.maximum(mb_t + posb_t, 0.0))

    # Fold batch into the lane (N) dimension: (D, B*HW).
    h_t = h_cols[0] if B == 1 else jnp.concatenate(h_cols, axis=1)

    # Second Linear applied once to all B*HW columns: (F, D) @ (D, B*HW).
    out_t = jnp.dot(w2t_ref[...], h_t, preferred_element_type=jnp.float32)
    out_ref[...] = (out_t + b2_ref[...]).astype(out_ref.dtype)


def soft_masked_broadcasting_synthesizer(slots, mask, pos_embed, w1, b1, w2, b2):
    """recon = relu((mask^T slots + pos) @ W1 + b1) @ W2 + b2, shape (B, HW, F)."""
    B, S, D = slots.shape
    HW = mask.shape[2]
    F = w2.shape[1]

    f32 = jnp.float32
    # Parameter-only precompute (once per model): pos_bias = pos_embed @ W1 + b1,
    # stored transposed as (D, HW).
    pos_bias_t = (pos_embed[0].astype(f32) @ w1.astype(f32) + b1.astype(f32)).T

    # Layout plumbing in the wrapper (cheap HBM transposes / casts).
    slots_t = jnp.swapaxes(slots, 1, 2).astype(f32)   # (B, D, S)
    mask_in = mask.astype(f32)                        # (B, S, HW)
    w1_t = w1.T.astype(f32)                           # (D, D)
    w2_t = w2.T.astype(f32)                           # (F, D)
    b2_col = b2.reshape(F, 1).astype(f32)             # (F, 1)

    vmem = pltpu.MemorySpace.VMEM
    out_t = pl.pallas_call(
        _synth_kernel,
        out_shape=jax.ShapeDtypeStruct((F, B * HW), f32),
        in_specs=[pl.BlockSpec(memory_space=vmem)] * 6,   # whole arrays, resident
        out_specs=pl.BlockSpec(memory_space=vmem),
    )(slots_t, mask_in, w1_t, pos_bias_t, w2_t, b2_col)

    # (F, B*HW) -> (B, HW, F): 8 KB transpose outside the kernel (layout only).
    return out_t.T.reshape(B, HW, F).astype(slots.dtype)


def reference_forward(slots, mask, pos_embed, w1, b1, w2, b2):
    mb = jnp.einsum('bsd,bsh->bhd', slots, mask) + pos_embed
    h = jnp.maximum(mb @ w1 + b1, 0.0)
    return h @ w2 + b2


if __name__ == "__main__":
    # Small shapes consistent with the module.
    B = 2          # batch
    S = 8          # number of slots
    SLOT_DIM = 32  # slot_dim
    HW = 64        # feat_shape (flattened 8x8 spatial grid)
    FEAT_DIM = 16  # feat_dim

    key = jax.random.PRNGKey(0)
    k_slots, k_mask, k_pos, k_w1, k_b1, k_w2, k_b2 = jax.random.split(key, 7)

    slots = jax.random.normal(k_slots, (B, S, SLOT_DIM), dtype=jnp.float32)
    # Soft mask over slots for each spatial position (as produced upstream).
    mask = jax.nn.softmax(
        jax.random.normal(k_mask, (B, S, HW), dtype=jnp.float32), axis=1)

    # Parameter init (shapes from __init__); weights stored (in, out) so the
    # math is x @ W + b.
    pos_embed = jax.random.normal(k_pos, (1, HW, SLOT_DIM), dtype=jnp.float32) * 0.02
    w1 = jax.random.normal(k_w1, (SLOT_DIM, SLOT_DIM), dtype=jnp.float32) * 0.05
    b1 = jax.random.normal(k_b1, (SLOT_DIM,), dtype=jnp.float32) * 0.01
    w2 = jax.random.normal(k_w2, (SLOT_DIM, FEAT_DIM), dtype=jnp.float32) * 0.05
    b2 = jax.random.normal(k_b2, (FEAT_DIM,), dtype=jnp.float32) * 0.01

    fwd = jax.jit(soft_masked_broadcasting_synthesizer)
    recon = jax.block_until_ready(fwd(slots, mask, pos_embed, w1, b1, w2, b2))

    ref = reference_forward(slots, mask, pos_embed, w1, b1, w2, b2)
    assert recon.shape == (B, HW, FEAT_DIM)
    # Everything is f32 now -> tight tolerance.
    assert jnp.allclose(recon, ref, atol=1e-4, rtol=1e-4), \
        float(jnp.max(jnp.abs(recon - ref)))

    # SynthesizerOutput equivalent: feedback=recon, reconstruction=recon,
    # alpha_weights=mask, feedback_type='v' (plain Python glue, no kernel needed).
    print("KERNEL_OK")
</pallas_src>

<mosaic_0001>
module attributes {stable_mosaic.version = 11 : i64} {
  func.func @_synth_kernel(%arg0: memref<2x32x8xf32, #tpu.memory_space<vmem>>, %arg1: memref<2x8x64xf32, #tpu.memory_space<vmem>>, %arg2: memref<32x32xf32, #tpu.memory_space<vmem>>, %arg3: memref<32x64xf32, #tpu.memory_space<vmem>>, %arg4: memref<16x32xf32, #tpu.memory_space<vmem>>, %arg5: memref<16x1xf32, #tpu.memory_space<vmem>>, %arg6: memref<16x128xf32, #tpu.memory_space<vmem>>) attributes {dimension_semantics = [], scalar_prefetch = 0 : i64, scratch_operands = 0 : i64, tpu.core_type = #tpu.core_type<tc>} {
    %c0 = arith.constant 0 : index
    %c0_0 = arith.constant 0 : index
    %0 = vector.load %arg2[%c0, %c0_0] : memref<32x32xf32, #tpu.memory_space<vmem>>, vector<32x32xf32>
    %c0_1 = arith.constant 0 : index
    %c0_2 = arith.constant 0 : index
    %1 = vector.load %arg3[%c0_1, %c0_2] : memref<32x64xf32, #tpu.memory_space<vmem>>, vector<32x64xf32>
    %c0_3 = arith.constant 0 : index
    %c0_4 = arith.constant 0 : index
    %c0_5 = arith.constant 0 : index
    %2 = vector.load %arg0[%c0_3, %c0_4, %c0_5] : memref<2x32x8xf32, #tpu.memory_space<vmem>>, vector<1x32x8xf32>
    %3 = vector.shape_cast %2 : vector<1x32x8xf32> to vector<32x8xf32>
    %cst = arith.constant dense<0.000000e+00> : vector<32x8xf32>
    %4 = tpu.matmul %0, %3, %cst {dimension_numbers = #tpu.dot_dimension_numbers<[1], [0], [0], [1], [0, 0, 1, 1], [], []>} : vector<32x32xf32>, vector<32x8xf32>, vector<32x8xf32> -> vector<32x8xf32>
    %c0_6 = arith.constant 0 : index
    %c0_7 = arith.constant 0 : index
    %c0_8 = arith.constant 0 : index
    %5 = vector.load %arg1[%c0_6, %c0_7, %c0_8] : memref<2x8x64xf32, #tpu.memory_space<vmem>>, vector<1x8x64xf32>
    %6 = vector.shape_cast %5 : vector<1x8x64xf32> to vector<8x64xf32>
    %cst_9 = arith.constant dense<0.000000e+00> : vector<32x64xf32>
    %7 = tpu.matmul %4, %6, %cst_9 {dimension_numbers = #tpu.dot_dimension_numbers<[1], [0], [0], [1], [0, 0, 1, 1], [], []>} : vector<32x8xf32>, vector<8x64xf32>, vector<32x64xf32> -> vector<32x64xf32>
    %8 = arith.addf %7, %1 : vector<32x64xf32>
    %cst_10 = arith.constant 0.000000e+00 : f32
    %9 = vector.broadcast %cst_10 : f32 to vector<32x64xf32>
    %10 = arith.maximumf %8, %9 : vector<32x64xf32>
    %c1 = arith.constant 1 : index
    %c0_11 = arith.constant 0 : index
    %c0_12 = arith.constant 0 : index
    %11 = vector.load %arg0[%c1, %c0_11, %c0_12] : memref<2x32x8xf32, #tpu.memory_space<vmem>>, vector<1x32x8xf32>
    %12 = vector.shape_cast %11 : vector<1x32x8xf32> to vector<32x8xf32>
    %cst_13 = arith.constant dense<0.000000e+00> : vector<32x8xf32>
    %13 = tpu.matmul %0, %12, %cst_13 {dimension_numbers = #tpu.dot_dimension_numbers<[1], [0], [0], [1], [0, 0, 1, 1], [], []>} : vector<32x32xf32>, vector<32x8xf32>, vector<32x8xf32> -> vector<32x8xf32>
    %c1_14 = arith.constant 1 : index
    %c0_15 = arith.constant 0 : index
    %c0_16 = arith.constant 0 : index
    %14 = vector.load %arg1[%c1_14, %c0_15, %c0_16] : memref<2x8x64xf32, #tpu.memory_space<vmem>>, vector<1x8x64xf32>
    %15 = vector.shape_cast %14 : vector<1x8x64xf32> to vector<8x64xf32>
    %cst_17 = arith.constant dense<0.000000e+00> : vector<32x64xf32>
    %16 = tpu.matmul %13, %15, %cst_17 {dimension_numbers = #tpu.dot_dimension_numbers<[1], [0], [0], [1], [0, 0, 1, 1], [], []>} : vector<32x8xf32>, vector<8x64xf32>, vector<32x64xf32> -> vector<32x64xf32>
    %17 = arith.addf %16, %1 : vector<32x64xf32>
    %cst_18 = arith.constant 0.000000e+00 : f32
    %18 = vector.broadcast %cst_18 : f32 to vector<32x64xf32>
    %19 = arith.maximumf %17, %18 : vector<32x64xf32>
    %20 = tpu.concatenate %10, %19 in 1 : vector<32x64xf32>, vector<32x64xf32> -> vector<32x128xf32>
    %c0_19 = arith.constant 0 : index
    %c0_20 = arith.constant 0 : index
    %21 = vector.load %arg4[%c0_19, %c0_20] : memref<16x32xf32, #tpu.memory_space<vmem>>, vector<16x32xf32>
    %cst_21 = arith.constant dense<0.000000e+00> : vector<16x128xf32>
    %22 = tpu.matmul %21, %20, %cst_21 {dimension_numbers = #tpu.dot_dimension_numbers<[1], [0], [0], [1], [0, 0, 1, 1], [], []>} : vector<16x32xf32>, vector<32x128xf32>, vector<16x128xf32> -> vector<16x128xf32>
    %c0_22 = arith.constant 0 : index
    %c0_23 = arith.constant 0 : index
    %23 = vector.load %arg5[%c0_22, %c0_23] : memref<16x1xf32, #tpu.memory_space<vmem>>, vector<16x1xf32>
    %24 = vector.broadcast %23 : vector<16x1xf32> to vector<16x128xf32>
    %25 = arith.addf %22, %24 : vector<16x128xf32>
    %c0_24 = arith.constant 0 : index
    %c0_25 = arith.constant 0 : index
    %26 = vector.load %arg6[%c0_24, %c0_25] : memref<16x128xf32, #tpu.memory_space<vmem>>, vector<16x128xf32>
    tpu.vector_store %arg6[%c0_24, %c0_25], %25 {strides = array<i32>} : memref<16x128xf32, #tpu.memory_space<vmem>>, vector<16x128xf32>,
    return
  }
}

</mosaic_0001>

<llo_original>
// kernel: soft_masked_broadcasting_synthesizer.1
$region0: #{soft_masked_broadcasting_synthesizer.1}
  #allocation0 [shape = 'u32[]', space=smem, size = 0x4, offset = 0x4, fixed_abs, tag = 'smem constant byte address 0x4 - core index']
  #allocation1 [shape = 'u32[72,128]{1,0:T(1,128)}', space=vmem, size = 0x9000, scoped, tag = 'internal scratch']
  %s0 = inlined_call_operand.vmem [shape: f32[2,32,8], index: 0, kind: input, shape index: {}]
  %s1 = inlined_call_operand.vmem [shape: f32[2,8,64], index: 1, kind: input, shape index: {}]
  %s2 = inlined_call_operand.vmem [shape: f32[32,32], index: 2, kind: input, shape index: {}]
  %s3 = inlined_call_operand.vmem [shape: f32[32,64], index: 3, kind: input, shape index: {}]
  %s4 = inlined_call_operand.vmem [shape: f32[16,32], index: 4, kind: input, shape index: {}]
  %s5 = inlined_call_operand.vmem [shape: f32[16,1], index: 5, kind: input, shape index: {}]
  %s6 = inlined_call_operand.vmem [shape: f32[16,128], index: 6, kind: output, shape index: {}]
  %s7 = sld [smem:[#allocation0]]
  $region34: #{soft_masked_broadcasting_synthesizer.1} parent=0
    _
  %s9 = ssub.s32 1, %s7
  %s10 = scalar_select 0, %s9, %s7
  // Predicated region
  $region2: #{soft_masked_broadcasting_synthesizer.1} parent=0 // pred_check
    _
  $region3: #{soft_masked_broadcasting_synthesizer.1} parent=0 // pred_check_branch
    %12 = sbr.rel (0) target = $region5
  $region4: #{soft_masked_broadcasting_synthesizer.1} parent=0 // pred_region
    _
  $region5: #{soft_masked_broadcasting_synthesizer.1} parent=0 // pred_fallthru
    _
  // Predicated region
  $region6: #{soft_masked_broadcasting_synthesizer.1} parent=0 // pred_check
    _
  $region7: #{soft_masked_broadcasting_synthesizer.1} parent=0 // pred_check_branch
    %14 = sbr.rel (0) target = $region9
  $region8: #{soft_masked_broadcasting_synthesizer.1} parent=0 // pred_region
    _
  $region9: #{soft_masked_broadcasting_synthesizer.1} parent=0 // pred_fallthru
    _
  // Predicated region
  $region10: #{soft_masked_broadcasting_synthesizer.1} parent=0 // pred_check
    _
  $region11: #{soft_masked_broadcasting_synthesizer.1} parent=0 // pred_check_branch
    %16 = sbr.rel (0) target = $region13
  $region12: #{soft_masked_broadcasting_synthesizer.1} parent=0 // pred_region
    _
  $region13: #{soft_masked_broadcasting_synthesizer.1} parent=0 // pred_fallthru
    _
  // Predicated region
  $region14: #{soft_masked_broadcasting_synthesizer.1} parent=0 // pred_check
    _
  $region15: #{soft_masked_broadcasting_synthesizer.1} parent=0 // pred_check_branch
    %18 = sbr.rel (0) target = $region17
  $region16: #{soft_masked_broadcasting_synthesizer.1} parent=0 // pred_region
    _
  $region17: #{soft_masked_broadcasting_synthesizer.1} parent=0 // pred_fallthru
    _
  // Predicated region
  $region18: #{soft_masked_broadcasting_synthesizer.1} parent=0 // pred_check
    _
  $region19: #{soft_masked_broadcasting_synthesizer.1} parent=0 // pred_check_branch
    %20 = sbr.rel (0) target = $region21
  $region20: #{soft_masked_broadcasting_synthesizer.1} parent=0 // pred_region
    _
  $region21: #{soft_masked_broadcasting_synthesizer.1} parent=0 // pred_fallthru
    _
  // Predicated region
  $region22: #{soft_masked_broadcasting_synthesizer.1} parent=0 // pred_check
    _
  $region23: #{soft_masked_broadcasting_synthesizer.1} parent=0 // pred_check_branch
    %22 = sbr.rel (0) target = $region25
  $region24: #{soft_masked_broadcasting_synthesizer.1} parent=0 // pred_region
    _
  $region25: #{soft_masked_broadcasting_synthesizer.1} parent=0 // pred_fallthru
    _
  %v23 = vld [vmem:[%s2] sm:$0xff]
  %v24 = vld [vmem:[%s2 + $0x8] sm:$0xff]
  %v25 = vld [vmem:[%s2 + $0x10] sm:$0xff]
  %v26 = vld [vmem:[%s2 + $0x18] sm:$0xff]
  %v27 = vld [vmem:[%s3] sm:$0xff]
  %v28 = vld [vmem:[%s3 + $0x8] sm:$0xff]
  %v29 = vld [vmem:[%s3 + $0x10] sm:$0xff]
  %v30 = vld [vmem:[%s3 + $0x18] sm:$0xff]
  %v31 = vld [vmem:[%s0] sm:$0xff]
  %v32 = vld [vmem:[%s0 + $0x8] sm:$0xff]
  %v33 = vld [vmem:[%s0 + $0x10] sm:$0xff]
  %v34 = vld [vmem:[%s0 + $0x18] sm:$0xff]
  %vm35 = vcmask 261120
  %v37 = vsel %vm35, %v23, 0
  %v40 = vsel %vm35, %v24, 0
  %v43 = vsel %vm35, %v25, 0
  %v46 = vsel %vm35, %v26, 0
  %48 = vmatpush.msra.mxu0 0.0
  %49 = vmatpush.msra.mxu0 0.0
  %50 = vmatpush.msra.mxu0 0.0
  %51 = vmatpush.msra.mxu0 0.0
  %52 = vmatpush.msra.mxu0 0.0
  %53 = vmatpush.msra.mxu0 0.0
  %54 = vmatpush.msra.mxu0 0.0
  %55 = vmatpush.msra.mxu0 0.0
  %56 = vmatpush.msra.mxu0 0.0
  %57 = vmatpush.msra.mxu0 0.0
  %58 = vmatpush.msra.mxu0 0.0
  %59 = vmatpush.msra.mxu0 0.0
  %60 = vmatpush.msra.mxu0 %v34
  %61 = vmatpush.msra.mxu0 %v33
  %62 = vmatpush.msra.mxu0 %v32
  %63 = vmatpush.msra.mxu0 %v31
  %64 = vmatmul.f32.gmra.mxu0 %v37
  %v65 = vpop.f32.mrf.mxu0
  %v66 = vadd.f32 0.0, %v65
  %67 = vmatmul.f32.gmra.mxu0 %v40
  %v68 = vpop.f32.mrf.mxu0
  %v69 = vadd.f32 0.0, %v68
  %70 = vmatmul.f32.gmra.mxu0 %v43
  %v71 = vpop.f32.mrf.mxu0
  %v72 = vadd.f32 0.0, %v71
  %73 = vmatmul.f32.gmra.mxu0 %v46
  %v74 = vpop.f32.mrf.mxu0
  %v75 = vadd.f32 0.0, %v74
  %76 = vdwg.mxu0
  %v77 = vld [vmem:[%s1] sm:$0xff]
  %vm78 = vcmask 64512
  %v80 = vsel %vm78, %v66, 0
  %v83 = vsel %vm78, %v69, 0
  %v86 = vsel %vm78, %v72, 0
  %v89 = vsel %vm78, %v75, 0
  %91 = vmatpush.msra.mxu0 0.0
  %92 = vmatpush.msra.mxu0 0.0
  %93 = vmatpush.msra.mxu0 0.0
  %94 = vmatpush.msra.mxu0 0.0
  %95 = vmatpush.msra.mxu0 0.0
  %96 = vmatpush.msra.mxu0 0.0
  %97 = vmatpush.msra.mxu0 0.0
  %98 = vmatpush.msra.mxu0 0.0
  %99 = vmatpush.msra.mxu0 0.0
  %100 = vmatpush.msra.mxu0 0.0
  %101 = vmatpush.msra.mxu0 0.0
  %102 = vmatpush.msra.mxu0 0.0
  %103 = vmatpush.msra.mxu0 0.0
  %104 = vmatpush.msra.mxu0 0.0
  %105 = vmatpush.msra.mxu0 0.0
  %106 = vmatpush.msra.mxu0 %v77
  %107 = vmatmul.f32.gmra.mxu0 %v80
  %v108 = vpop.f32.mrf.mxu0
  %v109 = vadd.f32 %v27, %v108
  %110 = vmatmul.f32.gmra.mxu0 %v83
  %v111 = vpop.f32.mrf.mxu0
  %v112 = vadd.f32 %v28, %v111
  %113 = vmatmul.f32.gmra.mxu0 %v86
  %v114 = vpop.f32.mrf.mxu0
  %v115 = vadd.f32 %v29, %v114
  %116 = vmatmul.f32.gmra.mxu0 %v89
  %v117 = vpop.f32.mrf.mxu0
  %v118 = vadd.f32 %v30, %v117
  %119 = vdwg.mxu0
  %v120 = vmax.f32 %v109, 0.0
  %v121 = vmax.f32 %v112, 0.0
  %v122 = vmax.f32 %v115, 0.0
  %v123 = vmax.f32 %v118, 0.0
  %s124 = scalar_lea.vmem %s0, 32
  %v125 = vld [vmem:[%s124] sm:$0xff]
  %v126 = vld [vmem:[%s124 + $0x8] sm:$0xff]
  %v127 = vld [vmem:[%s124 + $0x10] sm:$0xff]
  %v128 = vld [vmem:[%s124 + $0x18] sm:$0xff]
  %129 = vmatpush.msra.mxu0 0.0
  %130 = vmatpush.msra.mxu0 0.0
  %131 = vmatpush.msra.mxu0 0.0
  %132 = vmatpush.msra.mxu0 0.0
  %133 = vmatpush.msra.mxu0 0.0
  %134 = vmatpush.msra.mxu0 0.0
  %135 = vmatpush.msra.mxu0 0.0
  %136 = vmatpush.msra.mxu0 0.0
  %137 = vmatpush.msra.mxu0 0.0
  %138 = vmatpush.msra.mxu0 0.0
  %139 = vmatpush.msra.mxu0 0.0
  %140 = vmatpush.msra.mxu0 0.0
  %141 = vmatpush.msra.mxu0 %v128
  %142 = vmatpush.msra.mxu0 %v127
  %143 = vmatpush.msra.mxu0 %v126
  %144 = vmatpush.msra.mxu0 %v125
  %145 = vmatmul.f32.gmra.mxu0 %v37
  %v146 = vpop.f32.mrf.mxu0
  %v147 = vadd.f32 0.0, %v146
  %148 = vmatmul.f32.gmra.mxu0 %v40
  %v149 = vpop.f32.mrf.mxu0
  %v150 = vadd.f32 0.0, %v149
  %151 = vmatmul.f32.gmra.mxu0 %v43
  %v152 = vpop.f32.mrf.mxu0
  %v153 = vadd.f32 0.0, %v152
  %154 = vmatmul.f32.gmra.mxu0 %v46
  %v155 = vpop.f32.mrf.mxu0
  %v156 = vadd.f32 0.0, %v155
  %157 = vdwg.mxu0
  %s158 = scalar_lea.vmem %s1, 8
  %v159 = vld [vmem:[%s158] sm:$0xff]
  %v161 = vsel %vm78, %v147, 0
  %v164 = vsel %vm78, %v150, 0
  %v167 = vsel %vm78, %v153, 0
  %v170 = vsel %vm78, %v156, 0
  %172 = vmatpush.msra.mxu0 0.0
  %173 = vmatpush.msra.mxu0 0.0
  %174 = vmatpush.msra.mxu0 0.0
  %175 = vmatpush.msra.mxu0 0.0
  %176 = vmatpush.msra.mxu0 0.0
  %177 = vmatpush.msra.mxu0 0.0
  %178 = vmatpush.msra.mxu0 0.0
  %179 = vmatpush.msra.mxu0 0.0
  %180 = vmatpush.msra.mxu0 0.0
  %181 = vmatpush.msra.mxu0 0.0
  %182 = vmatpush.msra.mxu0 0.0
  %183 = vmatpush.msra.mxu0 0.0
  %184 = vmatpush.msra.mxu0 0.0
  %185 = vmatpush.msra.mxu0 0.0
  %186 = vmatpush.msra.mxu0 0.0
  %187 = vmatpush.msra.mxu0 %v159
  %188 = vmatmul.f32.gmra.mxu0 %v161
  %v189 = vpop.f32.mrf.mxu0
  %v190 = vadd.f32 %v27, %v189
  %191 = vmatmul.f32.gmra.mxu0 %v164
  %v192 = vpop.f32.mrf.mxu0
  %v193 = vadd.f32 %v28, %v192
  %194 = vmatmul.f32.gmra.mxu0 %v167
  %v195 = vpop.f32.mrf.mxu0
  %v196 = vadd.f32 %v29, %v195
  %197 = vmatmul.f32.gmra.mxu0 %v170
  %v198 = vpop.f32.mrf.mxu0
  %v199 = vadd.f32 %v30, %v198
  %200 = vdwg.mxu0
  %v201 = vmax.f32 %v190, 0.0
  %v202 = vmax.f32 %v193, 0.0
  %v203 = vmax.f32 %v196, 0.0
  %v204 = vmax.f32 %v199, 0.0
  %209 = vrot.lane.b32.xlu0 %v201, 64
  %v210 = vpop.permute.xlu0 %209
  %211 = vrot.lane.b32.xlu0 %v202, 64
  %v212 = vpop.permute.xlu0 %211
  %213 = vrot.lane.b32.xlu0 %v203, 64
  %v214 = vpop.permute.xlu0 %213
  %215 = vrot.lane.b32.xlu0 %v204, 64
  %v216 = vpop.permute.xlu0 %215
  %vm221 = vcmask 523264
  %v222 = vsel %vm221, %v120, %v210
  %v223 = vsel %vm221, %v121, %v212
  %v224 = vsel %vm221, %v122, %v214
  %v225 = vsel %vm221, %v123, %v216
  %v226 = vld [vmem:[%s4] sm:$0xff]
  %v227 = vld [vmem:[%s4 + $0x8] sm:$0xff]
  %v228 = vld [vmem:[%s5] sm:$0xff]
  %v229 = vld [vmem:[%s5 + $0x8] sm:$0xff]
  %231 = vset.pattern.permute.xlu0 0
  %232 = vperm.xlu0 %231, %v228
  %v233 = vpop.permute.xlu0 %232
  %236 = vset.pattern.permute.xlu0 0
  %237 = vperm.xlu0 %236, %v229
  %v238 = vpop.permute.xlu0 %237
  %v241 = vsel %vm35, %v226, 0
  %v244 = vsel %vm35, %v227, 0
  %246 = vmatpush.msra.mxu0 0.0
  %247 = vmatpush.msra.mxu0 0.0
  %248 = vmatpush.msra.mxu0 0.0
  %249 = vmatpush.msra.mxu0 0.0
  %250 = vmatpush.msra.mxu0 0.0
  %251 = vmatpush.msra.mxu0 0.0
  %252 = vmatpush.msra.mxu0 0.0
  %253 = vmatpush.msra.mxu0 0.0
  %254 = vmatpush.msra.mxu0 0.0
  %255 = vmatpush.msra.mxu0 0.0
  %256 = vmatpush.msra.mxu0 0.0
  %257 = vmatpush.msra.mxu0 0.0
  %258 = vmatpush.msra.mxu0 %v225
  %259 = vmatpush.msra.mxu0 %v224
  %260 = vmatpush.msra.mxu0 %v223
  %261 = vmatpush.msra.mxu0 %v222
  %262 = vmatmul.f32.gmra.mxu0 %v241
  %v263 = vpop.f32.mrf.mxu0
  %v264 = vadd.f32 %v233, %v263
  %265 = vmatmul.f32.gmra.mxu0 %v244
  %v266 = vpop.f32.mrf.mxu0
  %v267 = vadd.f32 %v238, %v266
  %268 = vdwg.mxu0
  %269 = vst [vmem:[%s6] sm:$0xff] %v264
  %270 = vst [vmem:[%s6 + $0x8] sm:$0xff] %v267
  // Predicated region
  $region26: #{soft_masked_broadcasting_synthesizer.1} parent=0 // pred_check
    _
  $region27: #{soft_masked_broadcasting_synthesizer.1} parent=0 // pred_check_branch
    %272 = sbr.rel (0) target = $region29
  $region28: #{soft_masked_broadcasting_synthesizer.1} parent=0 // pred_region
    _
  $region29: #{soft_masked_broadcasting_synthesizer.1} parent=0 // pred_fallthru
    _
  // Predicated region
  $region30: #{soft_masked_broadcasting_synthesizer.1} parent=0 // pred_check
    _
  $region31: #{soft_masked_broadcasting_synthesizer.1} parent=0 // pred_check_branch
    %274 = sbr.rel (0) target = $region33
  $region32: #{soft_masked_broadcasting_synthesizer.1} parent=0 // pred_region
    _
  $region33: #{soft_masked_broadcasting_synthesizer.1} parent=0 // pred_fallthru
    _

</llo_original>
